<compile_context>
chip_gen: v7x
topology: tpu7x:2x2x1
jax: 0.10.0
libtpu: 0.0.40
codegen_flags: <defaults>
</compile_context>

<pallas_src>
import functools

import jax
import jax.numpy as jnp
from jax.experimental import pallas as pl
from jax.experimental.pallas import tpu as pltpu

LANES = 128
MAX_ROW_TILE = 2048  # 2048 x 128 x 4B = 1 MiB per f32 input block


def _l1_kernel(x_ref, y_ref, o_ref, *, row_tile, rows, tiles_per_part, need_mask):
    t = pl.program_id(1)

    @pl.when(t == 0)
    def _():
        o_ref[...] = jnp.zeros_like(o_ref)

    diff = jnp.abs(x_ref[...].astype(jnp.float32) - y_ref[...].astype(jnp.float32))

    if need_mask:
        p = pl.program_id(0)
        tile_idx = p * tiles_per_part + t
        row_ids = tile_idx * row_tile + jax.lax.broadcasted_iota(
            jnp.int32, (row_tile, LANES), 0
        )
        diff = jnp.where(row_ids < rows, diff, 0.0)

    # Per-lane partial sums; the cross-lane reduction happens once, outside.
    o_ref[...] += jnp.sum(diff, axis=0, keepdims=True)[None]


def l1_loss(inp, target, object_index=None):
    """Mean absolute error over all elements (nn.L1Loss, reduction='mean')."""
    del object_index  # unused, as in the reference module
    assert inp.shape == target.shape, "L1Loss requires matching shapes"
    n_valid = inp.size

    x = inp.reshape(-1)
    y = target.reshape(-1)

    # Minimal pad (< 128 elements) so the flat arrays reshape to (rows, 128).
    # Pad values are identical (zero) in both arrays -> contribute 0 to |x-y|.
    rem = n_valid % LANES
    if rem:
        pad = LANES - rem
        x = jnp.pad(x, (0, pad))
        y = jnp.pad(y, (0, pad))
    rows = x.size // LANES
    x2 = x.reshape(rows, LANES)
    y2 = y.reshape(rows, LANES)

    # Tiling: one block if the whole slab fits, otherwise 1-MiB row tiles.
    row_tile = rows if rows <= MAX_ROW_TILE else MAX_ROW_TILE
    n_tiles = pl.cdiv(rows, row_tile)

    # 2-way split on a leading "parallel" axis so v7x can use both TensorCores.
    num_parts = 2 if n_tiles >= 2 else 1
    tiles_per_part = pl.cdiv(n_tiles, num_parts)
    even_split = num_parts * tiles_per_part == n_tiles
    need_mask = (not even_split) or (rows % row_tile != 0)

    if even_split:
        def in_map(p, t):
            return (p * tiles_per_part + t, 0)
    else:
        # Clamp overhanging tiles onto the last real tile; their contribution
        # is zeroed by the in-kernel row mask.
        def in_map(p, t):
            return (jnp.minimum(p * tiles_per_part + t, n_tiles - 1), 0)

    kernel = functools.partial(
        _l1_kernel,
        row_tile=row_tile,
        rows=rows,
        tiles_per_part=tiles_per_part,
        need_mask=need_mask,
    )

    partial_sums = pl.pallas_call(
        kernel,
        out_shape=jax.ShapeDtypeStruct((num_parts, 1, LANES), jnp.float32),
        grid_spec=pltpu.PrefetchScalarGridSpec(
            num_scalar_prefetch=0,
            grid=(num_parts, tiles_per_part),
            in_specs=[
                pl.BlockSpec((row_tile, LANES), in_map),
                pl.BlockSpec((row_tile, LANES), in_map),
            ],
            out_specs=pl.BlockSpec((1, 1, LANES), lambda p, t: (p, 0, 0)),
        ),
        compiler_params=pltpu.CompilerParams(
            dimension_semantics=("parallel", "arbitrary"),
        ),
    )(x2, y2)

    loss = jnp.sum(partial_sums) / jnp.float32(n_valid)
    # PyTorch returns a 0-dim tensor in the input dtype.
    return loss.astype(inp.dtype)


if __name__ == "__main__":
    key = jax.random.PRNGKey(0)
    k1, k2, k3, k4 = jax.random.split(key, 4)

    # Small pose-estimation-style heatmaps (NCHW).
    x = jax.random.normal(k1, (2, 4, 16, 16), dtype=jnp.float32)
    t = jax.random.normal(k2, (2, 4, 16, 16), dtype=jnp.float32)
    object_index = jnp.arange(2, dtype=jnp.int32)  # unused by forward

    loss = jax.block_until_ready(l1_loss(x, t, object_index))
    ref = jnp.mean(jnp.abs(x - t))
    assert jnp.allclose(loss, ref, atol=1e-6, rtol=1e-6), (loss, ref)

    # Also exercise the multi-tile / parallel-split / masked-tail path.
    xb = jax.random.normal(k3, (8, 17, 64, 64), dtype=jnp.float32)
    tb = jax.random.normal(k4, (8, 17, 64, 64), dtype=jnp.float32)
    loss_b = jax.block_until_ready(l1_loss(xb, tb))
    ref_b = jnp.mean(jnp.abs(xb - tb))
    assert jnp.allclose(loss_b, ref_b, atol=1e-6, rtol=1e-4), (loss_b, ref_b)

    print("KERNEL_OK")
</pallas_src>

<mosaic_0001>
module attributes {stable_mosaic.version = 11 : i64} {
  func.func @_l1_kernel(%arg0: i32, %arg1: i32, %arg2: memref<16x128xf32, #tpu.memory_space<vmem>>, %arg3: memref<16x128xf32, #tpu.memory_space<vmem>>, %arg4: memref<1x1x128xf32, #tpu.memory_space<vmem>>) attributes {dimension_semantics = [#tpu.dimension_semantics<parallel>, #tpu.dimension_semantics<arbitrary>], iteration_bounds = array<i64: 1, 1>, scalar_prefetch = 0 : i64, scratch_operands = 0 : i64, tpu.core_type = #tpu.core_type<tc>, window_params = [{transform_indices = @transform_0, window_bounds = array<i64: 16, 128>}, {transform_indices = @transform_1, window_bounds = array<i64: 16, 128>}, {transform_indices = @transform_2, window_bounds = array<i64: 1, 1, 128>}]} {
    %c0_i32 = arith.constant 0 : i32
    %0 = arith.cmpi eq, %arg1, %c0_i32 : i32
    %1 = arith.extui %0 : i1 to i32
    %c0_i32_0 = arith.constant 0 : i32
    %2 = arith.cmpi ne, %1, %c0_i32_0 : i32
    scf.if %2 {
      %cst_10 = arith.constant 0.000000e+00 : f32
      %13 = vector.broadcast %cst_10 : f32 to vector<1x1x128xf32>
      %c0_11 = arith.constant 0 : index
      %c0_12 = arith.constant 0 : index
      %c0_13 = arith.constant 0 : index
      %14 = vector.load %arg4[%c0_11, %c0_12, %c0_13] : memref<1x1x128xf32, #tpu.memory_space<vmem>>, vector<1x1x128xf32>
      tpu.vector_store %arg4[%c0_11, %c0_12, %c0_13], %13 {strides = array<i32>} : memref<1x1x128xf32, #tpu.memory_space<vmem>>, vector<1x1x128xf32>,
    } else {
    }
    %c0 = arith.constant 0 : index
    %c0_1 = arith.constant 0 : index
    %3 = vector.load %arg2[%c0, %c0_1] : memref<16x128xf32, #tpu.memory_space<vmem>>, vector<16x128xf32>
    %c0_2 = arith.constant 0 : index
    %c0_3 = arith.constant 0 : index
    %4 = vector.load %arg3[%c0_2, %c0_3] : memref<16x128xf32, #tpu.memory_space<vmem>>, vector<16x128xf32>
    %5 = arith.subf %3, %4 : vector<16x128xf32>
    %6 = math.absf %5 : vector<16x128xf32>
    %c0_4 = arith.constant 0 : index
    %c0_5 = arith.constant 0 : index
    %c0_6 = arith.constant 0 : index
    %7 = vector.load %arg4[%c0_4, %c0_5, %c0_6] : memref<1x1x128xf32, #tpu.memory_space<vmem>>, vector<1x1x128xf32>
    %cst = arith.constant dense<0.000000e+00> : vector<128xf32>
    %8 = vector.multi_reduction <add>, %6, %cst [0] : vector<16x128xf32> to vector<128xf32>
    %9 = vector.shape_cast %8 : vector<128xf32> to vector<1x128xf32>
    %10 = vector.shape_cast %9 : vector<1x128xf32> to vector<1x1x128xf32>
    %11 = arith.addf %7, %10 : vector<1x1x128xf32>
    %c0_7 = arith.constant 0 : index
    %c0_8 = arith.constant 0 : index
    %c0_9 = arith.constant 0 : index
    %12 = vector.load %arg4[%c0_7, %c0_8, %c0_9] : memref<1x1x128xf32, #tpu.memory_space<vmem>>, vector<1x1x128xf32>
    tpu.vector_store %arg4[%c0_7, %c0_8, %c0_9], %11 {strides = array<i32>} : memref<1x1x128xf32, #tpu.memory_space<vmem>>, vector<1x1x128xf32>,
    return
  }
  func.func @transform_0(%arg0: i32, %arg1: i32) -> (i32, i32) {
    %c1_i32 = arith.constant 1 : i32
    %0 = arith.muli %arg0, %c1_i32 : i32
    %1 = arith.addi %0, %arg1 : i32
    %c0_i32 = arith.constant 0 : i32
    %c0_i32_0 = arith.constant 0 : i32
    return %1, %c0_i32 : i32, i32
  }
  func.func @transform_1(%arg0: i32, %arg1: i32) -> (i32, i32) {
    %c1_i32 = arith.constant 1 : i32
    %0 = arith.muli %arg0, %c1_i32 : i32
    %1 = arith.addi %0, %arg1 : i32
    %c0_i32 = arith.constant 0 : i32
    %c0_i32_0 = arith.constant 0 : i32
    return %1, %c0_i32 : i32, i32
  }
  func.func @transform_2(%arg0: i32, %arg1: i32) -> (i32, i32, i32) {
    %c0_i32 = arith.constant 0 : i32
    %c0_i32_0 = arith.constant 0 : i32
    %c0_i32_1 = arith.constant 0 : i32
    return %arg0, %c0_i32, %c0_i32_0 : i32, i32, i32
  }
}

</mosaic_0001>

<llo_original>
// kernel: tpu_custom_call.1
$region0: #{tpu_custom_call.1}
  #allocation0 [shape = 'u32[]', space=smem, size = 0x4, offset = 0x4, fixed_abs, tag = 'smem constant byte address 0x4 - core index']
  #allocation1 [shape = 'u32[144,128]{1,0:T(1,128)}', space=vmem, size = 0x12000, scoped, tag = 'internal scratch']
  %s0 = inlined_call_operand.hbm [shape: f32[16,128], index: 0, kind: input, shape index: {}]
  %s1 = inlined_call_operand.hbm [shape: f32[16,128], index: 1, kind: input, shape index: {}]
  %s2 = inlined_call_operand.hbm [shape: f32[1,1,128], index: 2, kind: output, shape index: {}]
  %s3 = sld [smem:[#allocation0]]
  $region30: #{tpu_custom_call.1} parent=0
    _
  %s5 = ssub.s32 1, %s3
  %s6 = scalar_select 0, %s5, %s3
  $region1: #{tpu_custom_call.1} parent=0
    #allocation2 [shape = 'u8[8192]{0}', space=vmem, size = 0x2000, scoped, tag = 'input window, operand 0, single buffered']
    #allocation3 [shape = 's32[1]{0}', space=sflag, size = 0x4, scoped, tag = 'scoped memory for tpu_custom_call.1']
    #allocation4 [shape = 's32[1]{0}', space=sflag, size = 0x4, scoped, tag = 'scoped memory for tpu_custom_call.1']
    #allocation5 [shape = 'u8[8192]{0}', space=vmem, size = 0x2000, scoped, tag = 'input window, operand 1, single buffered']
    #allocation6 [shape = 's32[1]{0}', space=sflag, size = 0x4, scoped, tag = 'scoped memory for tpu_custom_call.1']
    #allocation7 [shape = 'u8[512]{0}', space=vmem, size = 0x400, scoped, tag = 'output window, operand 0, single buffered']
    %7 = vsyncpa [#allocation3], 0
    %8 = vsyncpa [#allocation6], 0
    %9 = vsyncpa [#allocation4], 0
    // Predicated region
    $region2: #{tpu_custom_call.1} parent=1 // pred_check
      _
    $region3: #{tpu_custom_call.1} parent=1 // pred_check_branch
      %11 = sbr.rel (0) target = $region5
    $region4: #{tpu_custom_call.1} parent=1 // pred_region
      %s12 = sadd.s32 0, 0
      %s13 = smul.u32 2, %s12
      %s15 = ssub.s32 256, 256
      %16 = vsyncadd [#allocation3], %s15
      %s17 = smul.addr %s13, 128
      %s18 = scalar_lea.hbm %s0, %s17
      %s19 = sshll.u32 [#allocation2], 4
      %s20 = int_to_ptr.vmem [resolvable:$true] %s19
      %25 = dma.hbm_to_vmem [thread:$0]  %s18, 256, %s20, [#allocation3], 128, 128, 8
    $region5: #{tpu_custom_call.1} parent=1 // pred_fallthru
      _
    // Predicated region
    $region6: #{tpu_custom_call.1} parent=1 // pred_check
      _
    $region7: #{tpu_custom_call.1} parent=1 // pred_check_branch
      %27 = sbr.rel (0) target = $region9
    $region8: #{tpu_custom_call.1} parent=1 // pred_region
      %s28 = sadd.s32 0, 0
      %s29 = smul.u32 2, %s28
      %s31 = ssub.s32 256, 256
      %32 = vsyncadd [#allocation6], %s31
      %s33 = smul.addr %s29, 128
      %s34 = scalar_lea.hbm %s1, %s33
      %s35 = sshll.u32 [#allocation5], 4
      %s36 = int_to_ptr.vmem [resolvable:$true] %s35
      %41 = dma.hbm_to_vmem [thread:$0]  %s34, 256, %s36, [#allocation6], 128, 128, 8
    $region9: #{tpu_custom_call.1} parent=1 // pred_fallthru
      _
    // Predicated region
    $region10: #{tpu_custom_call.1} parent=1 // pred_check
      _
    $region11: #{tpu_custom_call.1} parent=1 // pred_check_branch
      %43 = sbr.rel (0) target = $region13
    $region12: #{tpu_custom_call.1} parent=1 // pred_region
      %44 = dma.done [#allocation3], 256
    $region13: #{tpu_custom_call.1} parent=1 // pred_fallthru
      _
    // Predicated region
    $region14: #{tpu_custom_call.1} parent=1 // pred_check
      _
    $region15: #{tpu_custom_call.1} parent=1 // pred_check_branch
      %46 = sbr.rel (0) target = $region17
    $region16: #{tpu_custom_call.1} parent=1 // pred_region
      %47 = dma.done [#allocation6], 256
    $region17: #{tpu_custom_call.1} parent=1 // pred_fallthru
      _
    %s48 = sadd.s32 0, 0
    %s49 = smul.u32 2, %s48
    %s50 = sadd.s32 0, 0
    %s51 = smul.u32 2, %s50
    %p52 = scmp.eq.s32.totalorder 0, 0
    // Predicated region
    $region18: #{tpu_custom_call.1} parent=1 // pred_check
      %p53 = pneg %p52
    $region19: #{tpu_custom_call.1} parent=1 // pred_check_branch
      %55 = sbr.rel (%p53) target = $region21
    $region20: #{tpu_custom_call.1} parent=1 // pred_region
      %56 = vst [vmem:[#allocation7] sm:$0x1] 0.0
    $region21: #{tpu_custom_call.1} parent=1 // pred_fallthru
      _
    %v57 = vld [vmem:[#allocation2] sm:$0xff]
    %v58 = vld [vmem:[#allocation2 + $0x8] sm:$0xff]
    %v59 = vld [vmem:[#allocation5] sm:$0xff]
    %v60 = vld [vmem:[#allocation5 + $0x8] sm:$0xff]
    %v61 = vsub.f32 %v57, %v59
    %v62 = vsub.f32 %v58, %v60
    %v63 = vand.u32 2147483647, %v61
    %v64 = vand.u32 2147483647, %v62
    %v65 = vld [vmem:[#allocation7] sm:$0x1]
    %v66 = vadd.f32 %v63, %v64
    %v67 = vrot.slane %v66, 4
    %v68 = vadd.f32 %v66, %v67
    %v69 = vrot.slane %v68, 2
    %v70 = vadd.f32 %v68, %v69
    %v71 = vrot.slane %v70, 1
    %v72 = vadd.f32 %v70, %v71
    %v73 = vadd.f32 %v65, %v72
    %74 = vst [vmem:[#allocation7] sm:$0x1] %v73
    // Predicated region
    $region22: #{tpu_custom_call.1} parent=1 // pred_check
      _
    $region23: #{tpu_custom_call.1} parent=1 // pred_check_branch
      %76 = sbr.rel (0) target = $region25
    $region24: #{tpu_custom_call.1} parent=1 // pred_region
      %s78 = ssub.s32 16, 16
      %79 = vsyncadd [#allocation4], %s78
      %s81 = sshll.u32 [#allocation7], 4
      %s82 = int_to_ptr.vmem [resolvable:$true] %s81
      %84 = dma.vmem_to_hbm [thread:$0]  %s82, 16, %s2, [#allocation4]
    $region25: #{tpu_custom_call.1} parent=1 // pred_fallthru
      _
    // Predicated region
    $region26: #{tpu_custom_call.1} parent=1 // pred_check
      _
    $region27: #{tpu_custom_call.1} parent=1 // pred_check_branch
      %86 = sbr.rel (0) target = $region29
    $region28: #{tpu_custom_call.1} parent=1 // pred_region
      %87 = dma.done [#allocation4], 16
    $region29: #{tpu_custom_call.1} parent=1 // pred_fallthru
      _
    %88 = vsyncpa [#allocation3], 1
    %89 = vsyncpa [#allocation6], 1
    %90 = vsyncpa [#allocation4], 1

</llo_original>
